<compile_context>
chip_gen: v7x
topology: tpu7x:2x2x1
jax: 0.10.0
libtpu: 0.0.40
codegen_flags: <defaults>
</compile_context>

<pallas_src>
import functools

import jax
import jax.numpy as jnp
from jax import lax
from jax.experimental import pallas as pl
from jax.experimental.pallas import tpu as pltpu

ALPHA = 0.75
GAMMA = 2.0

_LANE = 128
_CHUNK_ELEMS = 8192      # target elements per in-kernel compute chunk (~8 f32 vregs)
_MIN_GRID_STEPS = 8      # keep both v7x TensorCores fed


def _modulating_factor(q, gamma):
    g = float(gamma)
    if g == 0.0:
        return jnp.ones_like(q)
    if g.is_integer() and 1.0 <= g <= 8.0:
        mod = q
        for _ in range(int(g) - 1):       # gamma=2 -> q*q, pure VALU (no pow)
            mod = mod * q
        return mod
    return q ** jnp.float32(g)            # general non-integer gamma fallback


def _focal_loss_kernel(x_ref, t_ref, out_ref, *, alpha, gamma, hw_total,
                       t_hw, bn, bc, cl):
    # x_ref:   (bn, C, t_hw) VMEM block (native dtype)
    # t_ref:   (bn, 1, t_hw) VMEM block (native dtype)
    # out_ref: (1, 1, 1, 128) f32 partial sum for this grid step
    need_mask = (hw_total % t_hw) != 0            # static: some block overruns HW
    lane_base = pl.program_id(1) * t_hw if need_mask else 0

    def tile_sum(b_off, b_sz, l_off, l_sz):
        """Focal-loss sum over a (b_sz, C, l_sz) sub-tile, folded to (1, 128) f32."""
        x = x_ref[pl.ds(b_off, b_sz), :, pl.ds(l_off, l_sz)].astype(jnp.float32)
        t = t_ref[pl.ds(b_off, b_sz), :, pl.ds(l_off, l_sz)].astype(jnp.float32)
        is_pos = t == jnp.float32(1.0)                                 # (b,1,l)
        p_t = jnp.where(is_pos, x, 1.0 - x)                            # (b,C,l)
        if need_mask:
            lanes = (lane_base + l_off
                     + lax.broadcasted_iota(jnp.int32, (1, 1, l_sz), 2))
            # Out-of-range lanes -> p_t = 1 -> q = 0, log(1) = 0 -> fl = 0.
            p_t = jnp.where(lanes < hw_total, p_t, jnp.float32(1.0))
        alpha_t = jnp.where(is_pos, jnp.float32(alpha),
                            jnp.float32(1.0 - alpha))                  # (b,1,l)
        fl = (-alpha_t) * _modulating_factor(1.0 - p_t, gamma) * jnp.log(p_t)
        # Static, vreg-aligned lane fold down to 128 lanes (pure VPU adds).
        folded = fl[..., 0:_LANE]
        for j in range(1, l_sz // _LANE):
            folded = folded + fl[..., j * _LANE:(j + 1) * _LANE]
        # (b_sz, C, 128): leading-axis sum (VPU) then sublane sum (XLU).
        return jnp.sum(folded, axis=0).sum(axis=0, keepdims=True)      # (1,128)

    n_lfull, l_rem = divmod(t_hw, cl)     # static; l_rem is a multiple of 128
    n_bfull, b_rem = divmod(bn, bc)       # static

    def lane_loop(b_off, b_sz, acc0):
        def l_body(c, a):
            off = c * cl
            if not isinstance(off, int):
                off = pl.multiple_of(off, _LANE)
            return a + tile_sum(b_off, b_sz, off, cl)
        if n_lfull == 1:
            acc0 = l_body(0, acc0)        # straight-line fast path
        else:
            acc0 = lax.fori_loop(0, n_lfull, l_body, acc0)
        if l_rem:
            acc0 = acc0 + tile_sum(b_off, b_sz, n_lfull * cl, l_rem)
        return acc0

    def b_body(b, a):
        return lane_loop(b * bc, bc, a)

    acc = jnp.zeros((1, _LANE), jnp.float32)
    if n_bfull == 1:
        acc = b_body(0, acc)
    else:
        acc = lax.fori_loop(0, n_bfull, b_body, acc)
    if b_rem:
        acc = lane_loop(n_bfull * bc, b_rem, acc)

    out_ref[...] = acc[None, None]        # (1, 1, 1, 128)


def _vmem_capacity_bytes():
    try:
        info = pltpu.get_tpu_info()
        cap = getattr(info, "vmem_capacity_bytes", None)
        if cap:
            return int(cap)
    except Exception:
        pass
    return 64 * 1024 * 1024               # conservative (v7x-sized) fallback


def _round_down(v, m):
    return (v // m) * m


def _round_up(v, m):
    return ((v + m - 1) // m) * m


def focal_loss(x, target, alpha=ALPHA, gamma=GAMMA):
    """Mean-reduced focal loss. x: [N,C,H,W] probabilities, target: [N,H,W] in {0,1}."""
    # TODO(synk): only reduction='mean' (the module default) is implemented;
    # 'sum' / 'none' would return the partial sums / the unreduced fl map instead.
    N, C, H, W = x.shape
    HW = H * W
    total_elems = N * C * HW

    x3 = x.reshape(N, C, HW)              # native dtype, no pad, no extra HBM copy
    t3 = target.reshape(N, 1, HW)

    x_item = jnp.dtype(x.dtype).itemsize

    # Generation-aware budgets: v7x has 64 MiB VMEM, v5e/v6e have 128 MiB.
    vmem_cap = _vmem_capacity_bytes()
    if vmem_cap <= 64 * 1024 * 1024:
        x_block_budget = 2 * 1024 * 1024
        vmem_limit = 32 * 1024 * 1024
    else:
        x_block_budget = 4 * 1024 * 1024
        vmem_limit = 64 * 1024 * 1024

    # Lane tile: multiple of 128, sized by the byte budget (whole HW if it fits).
    hw_pad = _round_up(HW, _LANE)
    max_lanes = max(_LANE, _round_down(x_block_budget // max(1, C * x_item), _LANE))
    t_hw = min(hw_pad, max_lanes)
    hw_tiles = pl.cdiv(HW, t_hw)

    # Batch blocking (only kicks in when C*HW is small relative to the budget),
    # capped so the grid keeps enough steps for the v7x megacore split.
    bn_cap = min(N, max(1, x_block_budget // (C * t_hw * x_item)))
    if hw_tiles < _MIN_GRID_STEPS:
        bn_cap = min(bn_cap, max(1, (N * hw_tiles) // _MIN_GRID_STEPS))
    bn = 1
    for d in range(1, bn_cap + 1):        # largest divisor of N (no ragged batch block)
        if N % d == 0:
            bn = d
    n_blocks = N // bn

    # In-kernel chunk sizes: ~_CHUNK_ELEMS elements per chunk keeps f32
    # temporaries in vregs instead of multi-MiB VMEM scratch.
    cl = min(t_hw, max(_LANE, min(2048, _round_down(_CHUNK_ELEMS // max(1, C), _LANE))))
    bc = max(1, min(bn, _CHUNK_ELEMS // max(1, C * cl)))

    kernel = functools.partial(
        _focal_loss_kernel, alpha=float(alpha), gamma=float(gamma),
        hw_total=HW, t_hw=t_hw, bn=bn, bc=bc, cl=cl)

    partials = pl.pallas_call(
        kernel,
        out_shape=jax.ShapeDtypeStruct((n_blocks, hw_tiles, 1, _LANE), jnp.float32),
        grid_spec=pltpu.PrefetchScalarGridSpec(
            num_scalar_prefetch=0,
            grid=(n_blocks, hw_tiles),
            in_specs=[
                pl.BlockSpec((bn, C, t_hw), lambda n, h: (n, 0, h)),
                pl.BlockSpec((bn, 1, t_hw), lambda n, h: (n, 0, h)),
            ],
            out_specs=pl.BlockSpec((1, 1, 1, _LANE), lambda n, h: (n, h, 0, 0)),
        ),
        compiler_params=pltpu.CompilerParams(
            dimension_semantics=("parallel", "parallel"),   # no carried state
            vmem_limit_bytes=vmem_limit,
        ),
    )(x3, t3)

    return jnp.sum(partials) / jnp.float32(total_elems)


def focal_loss_ref(x, target, alpha=ALPHA, gamma=GAMMA):
    t = target[:, None, :, :].astype(jnp.float32)
    x = x.astype(jnp.float32)
    is_pos = t == 1.0
    p_t = jnp.where(is_pos, x, 1.0 - x)
    alpha_t = jnp.where(is_pos, alpha, 1.0 - alpha)
    fl = -alpha_t * (1.0 - p_t) ** gamma * jnp.log(p_t)
    return jnp.mean(fl)


if __name__ == "__main__":
    key = jax.random.PRNGKey(0)
    kx, kt = jax.random.split(key)

    N, C, H, W = 2, 4, 16, 16
    # Probabilities in (0, 1), as the module's log(p_t) implies.
    x = jax.nn.sigmoid(jax.random.normal(kx, (N, C, H, W), dtype=jnp.float32))
    target = jax.random.bernoulli(kt, 0.5, (N, H, W)).astype(jnp.float32)

    out = focal_loss(x, target)
    jax.block_until_ready(out)

    ref = focal_loss_ref(x, target)
    assert jnp.allclose(out, ref, rtol=1e-5, atol=1e-6), (out, ref)
    print("KERNEL_OK")
</pallas_src>

<mosaic_0001>
module attributes {stable_mosaic.version = 11 : i64} {
  func.func @_focal_loss_kernel(%arg0: i32, %arg1: i32, %arg2: memref<1x4x256xf32, #tpu.memory_space<vmem>>, %arg3: memref<1x1x256xf32, #tpu.memory_space<vmem>>, %arg4: memref<1x1x1x128xf32, #tpu.memory_space<vmem>>) attributes {dimension_semantics = [#tpu.dimension_semantics<parallel>, #tpu.dimension_semantics<parallel>], iteration_bounds = array<i64: 2, 1>, scalar_prefetch = 0 : i64, scratch_operands = 0 : i64, tpu.core_type = #tpu.core_type<tc>, window_params = [{transform_indices = @transform_0, window_bounds = array<i64: 1, 4, 256>}, {transform_indices = @transform_1, window_bounds = array<i64: 1, 1, 256>}, {transform_indices = @transform_2, window_bounds = array<i64: 1, 1, 1, 128>}]} {
    %cst = arith.constant 0.000000e+00 : f32
    %0 = vector.broadcast %cst : f32 to vector<1x128xf32>
    %c0 = arith.constant 0 : index
    %c0_0 = arith.constant 0 : index
    %c0_1 = arith.constant 0 : index
    %1 = vector.load %arg2[%c0, %c0_0, %c0_1] : memref<1x4x256xf32, #tpu.memory_space<vmem>>, vector<1x4x256xf32>
    %c0_2 = arith.constant 0 : index
    %c0_3 = arith.constant 0 : index
    %c0_4 = arith.constant 0 : index
    %2 = vector.load %arg3[%c0_2, %c0_3, %c0_4] : memref<1x1x256xf32, #tpu.memory_space<vmem>>, vector<1x1x256xf32>
    %cst_5 = arith.constant 1.000000e+00 : f32
    %3 = vector.broadcast %cst_5 : f32 to vector<1x1x256xf32>
    %4 = arith.cmpf oeq, %2, %3 : vector<1x1x256xf32>
    %cst_6 = arith.constant 1.000000e+00 : f32
    %5 = vector.broadcast %cst_6 : f32 to vector<1x4x256xf32>
    %6 = arith.subf %5, %1 : vector<1x4x256xf32>
    %7 = vector.shape_cast %4 : vector<1x1x256xi1> to vector<1x1x256xi1>
    %8 = vector.broadcast %7 : vector<1x1x256xi1> to vector<1x4x256xi1>
    %9 = arith.select %8, %1, %6 : vector<1x4x256xi1>, vector<1x4x256xf32>
    %cst_7 = arith.constant 7.500000e-01 : f32
    %cst_8 = arith.constant 2.500000e-01 : f32
    %10 = vector.broadcast %cst_7 : f32 to vector<1x1x256xf32>
    %11 = vector.broadcast %cst_8 : f32 to vector<1x1x256xf32>
    %12 = arith.select %4, %10, %11 : vector<1x1x256xi1>, vector<1x1x256xf32>
    %cst_9 = arith.constant 0.000000e+00 : f32
    %13 = vector.broadcast %cst_9 : f32 to vector<1x1x256xf32>
    %14 = arith.subf %13, %12 : vector<1x1x256xf32>
    %cst_10 = arith.constant 1.000000e+00 : f32
    %15 = vector.broadcast %cst_10 : f32 to vector<1x4x256xf32>
    %16 = arith.subf %15, %9 : vector<1x4x256xf32>
    %17 = arith.mulf %16, %16 : vector<1x4x256xf32>
    %18 = vector.broadcast %14 : vector<1x1x256xf32> to vector<1x4x256xf32>
    %19 = arith.mulf %18, %17 : vector<1x4x256xf32>
    %20 = math.log %9 : vector<1x4x256xf32>
    %21 = arith.mulf %19, %20 : vector<1x4x256xf32>
    %22 = vector.extract_strided_slice %21 {offsets = [0, 0, 0], sizes = [1, 4, 128], strides = [1, 1, 1]} : vector<1x4x256xf32> to vector<1x4x128xf32>
    %23 = vector.extract_strided_slice %21 {offsets = [0, 0, 128], sizes = [1, 4, 128], strides = [1, 1, 1]} : vector<1x4x256xf32> to vector<1x4x128xf32>
    %24 = arith.addf %22, %23 : vector<1x4x128xf32>
    %cst_11 = arith.constant dense<0.000000e+00> : vector<4x128xf32>
    %25 = vector.multi_reduction <add>, %24, %cst_11 [0] : vector<1x4x128xf32> to vector<4x128xf32>
    %cst_12 = arith.constant dense<0.000000e+00> : vector<128xf32>
    %26 = vector.multi_reduction <add>, %25, %cst_12 [0] : vector<4x128xf32> to vector<128xf32>
    %27 = vector.shape_cast %26 : vector<128xf32> to vector<1x128xf32>
    %28 = arith.addf %0, %27 : vector<1x128xf32>
    %29 = vector.shape_cast %28 : vector<1x128xf32> to vector<1x1x1x128xf32>
    %c0_13 = arith.constant 0 : index
    %c0_14 = arith.constant 0 : index
    %c0_15 = arith.constant 0 : index
    %c0_16 = arith.constant 0 : index
    %30 = vector.load %arg4[%c0_13, %c0_14, %c0_15, %c0_16] : memref<1x1x1x128xf32, #tpu.memory_space<vmem>>, vector<1x1x1x128xf32>
    tpu.vector_store %arg4[%c0_13, %c0_14, %c0_15, %c0_16], %29 {strides = array<i32>} : memref<1x1x1x128xf32, #tpu.memory_space<vmem>>, vector<1x1x1x128xf32>,
    return
  }
  func.func @transform_0(%arg0: i32, %arg1: i32) -> (i32, i32, i32) {
    %c0_i32 = arith.constant 0 : i32
    %c0_i32_0 = arith.constant 0 : i32
    return %arg0, %c0_i32, %arg1 : i32, i32, i32
  }
  func.func @transform_1(%arg0: i32, %arg1: i32) -> (i32, i32, i32) {
    %c0_i32 = arith.constant 0 : i32
    %c0_i32_0 = arith.constant 0 : i32
    return %arg0, %c0_i32, %arg1 : i32, i32, i32
  }
  func.func @transform_2(%arg0: i32, %arg1: i32) -> (i32, i32, i32, i32) {
    %c0_i32 = arith.constant 0 : i32
    %c0_i32_0 = arith.constant 0 : i32
    %c0_i32_1 = arith.constant 0 : i32
    return %arg0, %arg1, %c0_i32, %c0_i32_0 : i32, i32, i32, i32
  }
}

</mosaic_0001>

<llo_original>
// kernel: tpu_custom_call.1
$region0: #{tpu_custom_call.1}
  #allocation0 [shape = 'u32[]', space=smem, size = 0x4, offset = 0x4, fixed_abs, tag = 'smem constant byte address 0x4 - core index']
  #allocation1 [shape = 'u32[144,128]{1,0:T(1,128)}', space=vmem, size = 0x12000, scoped, tag = 'internal scratch']
  %s0 = inlined_call_operand.hbm [shape: f32[2,4,256], index: 0, kind: input, shape index: {}]
  %s1 = inlined_call_operand.hbm [shape: f32[2,1,256], index: 1, kind: input, shape index: {}]
  %s2 = inlined_call_operand.hbm [shape: f32[2,1,1,128], index: 2, kind: output, shape index: {}]
  %s3 = sld [smem:[#allocation0]]
  $region49: #{tpu_custom_call.1} parent=0
    _
  %s5 = ssub.s32 1, %s3
  %s6 = scalar_select 0, %s5, %s3
  $region1: #{tpu_custom_call.1} parent=0
    #allocation2 [shape = 'u8[8192]{0}', space=vmem, size = 0x2000, scoped, tag = 'input window, operand 0']
    #allocation3 [shape = 's32[2]{0}', space=sflag, size = 0x8, scoped, tag = 'scoped memory for tpu_custom_call.1']
    #allocation4 [shape = 's32[2]{0}', space=sflag, size = 0x8, scoped, tag = 'scoped memory for tpu_custom_call.1']
    #allocation5 [shape = 'u8[2048]{0}', space=vmem, size = 0x800, scoped, tag = 'input window, operand 1']
    #allocation6 [shape = 's32[2]{0}', space=sflag, size = 0x8, scoped, tag = 'scoped memory for tpu_custom_call.1']
    #allocation7 [shape = 'u8[1024]{0}', space=vmem, size = 0x400, scoped, tag = 'output window, operand 0']
    %7 = vsyncpa [#allocation3], 0
    %s8 = scalar_lea.sflag [#allocation3], 1
    %9 = vsyncpa %s8, 0
    %10 = vsyncpa [#allocation6], 0
    %s11 = scalar_lea.sflag [#allocation6], 1
    %12 = vsyncpa %s11, 0
    %13 = vsyncpa [#allocation4], 0
    %s14 = scalar_lea.sflag [#allocation4], 1
    %15 = vsyncpa %s14, 0
    loop: start=0, step=1, limit=4
    $region2: #{tpu_custom_call.1} parent=1 // loop_pre_header
      _
    $region3: #{tpu_custom_call.1} parent=1 // loop_header
      %s17 = sphi 0, %s21
      %p18 = scmp.ge.s32.totalorder %s17, 4
      %s24 = sphi 0, %s36
      %s25 = sphi 0, %s32
      %s26 = sphi 0, %s24
      %s27 = sphi 0, %s25
      %s28 = sphi 0, %s26
      %s29 = sphi 0, %s27
      %s41 = sphi 0, %s43
      %s44 = sphi 0, %s41
      %s45 = sphi 0, %s44
      %s61 = sphi 0, %s45
      %s69 = sphi 0, %s71
      %s72 = sphi 0, %s69
      %s73 = sphi 0, %s72
      %s89 = sphi 0, %s73
      %s97 = sphi 0, %s99
      %s100 = sphi 0, %s97
      %s101 = sphi 0, %s100
      %s117 = sphi 0, %s101
    $region4: #{tpu_custom_call.1} parent=1 // loop_header_branch
      %20 = sbr.rel (%p18) target = $region8
    $region5: #{tpu_custom_call.1} parent=1 // loop_body
      %s22 = ssub.s32 %s17, 1
      %s23 = ssub.s32 %s17, 2
      %s30 = sadd.s32 1, %s25
      %p31 = scmp.ge.s32.totalorder %s30, 1
      %s32 = scalar_select %p31, 0, %s30
      %s33 = sadd.s32 1, %s24
      %s34 = scalar_select %p31, %s33, %s24
      %p35 = scmp.ge.s32.totalorder %s34, 2
      %s36 = scalar_select %p35, 0, %s34
      %s37 = ssub.s32 %s24, %s36
      %s38 = ssub.s32 %s25, %s32
      %s39 = sor.u32 %s37, %s38
      %p40 = scmp.eq.s32.totalorder %s39, 0
      %s42 = sadd.s32 %s41, 1
      %s43 = scalar_select %p40, %s41, %s42
      %p46 = pneg %p40
      %p47 = scmp.eq.s32.totalorder %s17, 1
      %p48 = por %p46, %p47
      %p49 = scmp.ne.s32.totalorder %s41, %s44
      %p50 = scmp.eq.s32.totalorder %s17, 0
      %p51 = por %p49, %p50
      %p52 = scmp.ne.s32.totalorder %s41, %s44
      %p53 = scmp.eq.s32.totalorder %s22, 1
      %p54 = por %p52, %p53
      %p55 = scmp.ne.s32.totalorder %s44, %s45
      %p56 = scmp.eq.s32.totalorder %s22, 0
      %p57 = por %p55, %p56
      %p58 = scmp.ne.s32.totalorder %s44, %s45
      %p59 = scmp.eq.s32.totalorder %s23, 1
      %p60 = por %p58, %p59
      %p62 = scmp.ne.s32.totalorder %s45, %s61
      %p63 = scmp.eq.s32.totalorder %s23, 0
      %p64 = por %p62, %p63
      %s65 = ssub.s32 %s24, %s36
      %s66 = ssub.s32 %s25, %s32
      %s67 = sor.u32 %s65, %s66
      %p68 = scmp.eq.s32.totalorder %s67, 0
      %s70 = sadd.s32 %s69, 1
      %s71 = scalar_select %p68, %s69, %s70
      %p74 = pneg %p68
      %p75 = scmp.eq.s32.totalorder %s17, 1
      %p76 = por %p74, %p75
      %p77 = scmp.ne.s32.totalorder %s69, %s72
      %p78 = scmp.eq.s32.totalorder %s17, 0
      %p79 = por %p77, %p78
      %p80 = scmp.ne.s32.totalorder %s69, %s72
      %p81 = scmp.eq.s32.totalorder %s22, 1
      %p82 = por %p80, %p81
      %p83 = scmp.ne.s32.totalorder %s72, %s73
      %p84 = scmp.eq.s32.totalorder %s22, 0
      %p85 = por %p83, %p84
      %p86 = scmp.ne.s32.totalorder %s72, %s73
      %p87 = scmp.eq.s32.totalorder %s23, 1
      %p88 = por %p86, %p87
      %p90 = scmp.ne.s32.totalorder %s73, %s89
      %p91 = scmp.eq.s32.totalorder %s23, 0
      %p92 = por %p90, %p91
      %s93 = ssub.s32 %s24, %s36
      %s94 = ssub.s32 %s25, %s32
      %s95 = sor.u32 %s93, %s94
      %p96 = scmp.eq.s32.totalorder %s95, 0
      %s98 = sadd.s32 %s97, 1
      %s99 = scalar_select %p96, %s97, %s98
      %p102 = pneg %p96
      %p103 = scmp.eq.s32.totalorder %s17, 1
      %p104 = por %p102, %p103
      %p105 = scmp.ne.s32.totalorder %s97, %s100
      %p106 = scmp.eq.s32.totalorder %s17, 0
      %p107 = por %p105, %p106
      %p108 = scmp.ne.s32.totalorder %s97, %s100
      %p109 = scmp.eq.s32.totalorder %s22, 1
      %p110 = por %p108, %p109
      %p111 = scmp.ne.s32.totalorder %s100, %s101
      %p112 = scmp.eq.s32.totalorder %s22, 0
      %p113 = por %p111, %p112
      %p114 = scmp.ne.s32.totalorder %s100, %s101
      %p115 = scmp.eq.s32.totalorder %s23, 1
      %p116 = por %p114, %p115
      %p118 = scmp.ne.s32.totalorder %s101, %s117
      %p119 = scmp.eq.s32.totalorder %s23, 0
      %p120 = por %p118, %p119
      %p121 = scmp.le.s32.totalorder 1, %s17
      %p122 = scmp.lt.s32.totalorder %s17, 3
      %p123 = pnand %p121, %p122
      %p124 = pneg %p123
      // Predicated region
      $region9: #{tpu_custom_call.1} parent=5 // pred_check
        _
      $region10: #{tpu_custom_call.1} parent=5 // pred_check_branch
        %126 = sbr.rel (%p123) target = $region12
      $region11: #{tpu_custom_call.1} parent=5 // pred_region
        %s127 = ssub.s32 %s17, 1
      $region12: #{tpu_custom_call.1} parent=5 // pred_fallthru
        _
      %p128 = scmp.lt.s32.totalorder %s17, 2
      // Predicated region
      $region13: #{tpu_custom_call.1} parent=5 // pred_check
        %p129 = pneg %p128
      $region14: #{tpu_custom_call.1} parent=5 // pred_check_branch
        %131 = sbr.rel (%p129) target = $region16
      $region15: #{tpu_custom_call.1} parent=5 // pred_region
        // Predicated region
        $region17: #{tpu_custom_call.1} parent=15 // pred_check
          %p132 = pneg %p51
        $region18: #{tpu_custom_call.1} parent=15 // pred_check_branch
          %134 = sbr.rel (%p132) target = $region20
        $region19: #{tpu_custom_call.1} parent=15 // pred_region
          %s135 = sand.u32 %s41, 1
          %s136 = scalar_lea.sflag [#allocation3], %s135
          %s137 = sand.u32 %s41, 1
          %s138 = smul.addr %s137, 8
          %s139 = scalar_lea.vmem [#allocation2], %s138
          %s140 = smul.u32 2, %s25
          %s142 = ssub.s32 128, 128
          %143 = vsyncadd %s136, %s142
          %s144 = smul.addr %s24, 2
          %s145 = sadd.s32 %s140, %s144
          %s146 = smul.addr %s145, 64
          %s147 = scalar_lea.hbm %s0, %s146
          %s149 = sshll.u32 %s139, 4
          %s150 = int_to_ptr.vmem [resolvable:$true] %s149
          %152 = dma.hbm_to_vmem [thread:$0]  %s147, 128, %s150, %s136
        $region20: #{tpu_custom_call.1} parent=15 // pred_fallthru
          _
        // Predicated region
        $region21: #{tpu_custom_call.1} parent=15 // pred_check
          %p153 = pneg %p79
        $region22: #{tpu_custom_call.1} parent=15 // pred_check_branch
          %155 = sbr.rel (%p153) target = $region24
        $region23: #{tpu_custom_call.1} parent=15 // pred_region
          %s156 = sand.u32 %s69, 1
          %s157 = scalar_lea.sflag [#allocation6], %s156
          %s158 = sand.u32 %s69, 1
          %s159 = smul.addr %s158, 2
          %s160 = scalar_lea.vmem [#allocation5], %s159
          %s161 = smul.u32 2, %s25
          %s163 = ssub.s32 32, 32
          %164 = vsyncadd %s157, %s163
          %s165 = smul.addr %s24, 2
          %s166 = sadd.s32 %s161, %s165
          %s167 = smul.addr %s166, 16
          %s168 = scalar_lea.hbm %s1, %s167
          %s170 = sshll.u32 %s160, 4
          %s171 = int_to_ptr.vmem [resolvable:$true] %s170
          %173 = dma.hbm_to_vmem [thread:$0]  %s168, 32, %s171, %s157
        $region24: #{tpu_custom_call.1} parent=15 // pred_fallthru
          _
      $region16: #{tpu_custom_call.1} parent=5 // pred_fallthru
        _
      %p174 = scmp.le.s32.totalorder 1, %s17
      %p175 = scmp.lt.s32.totalorder %s17, 3
      %p176 = pnand %p174, %p175
      %p177 = pneg %p176
      // Predicated region
      $region25: #{tpu_custom_call.1} parent=5 // pred_check
        _
      $region26: #{tpu_custom_call.1} parent=5 // pred_check_branch
        %179 = sbr.rel (%p176) target = $region28
      $region27: #{tpu_custom_call.1} parent=5 // pred_region
        %s180 = ssub.s32 %s17, 1
        %s181 = sand.u32 %s44, 1
        %s182 = scalar_lea.sflag [#allocation3], %s181
        %s183 = sand.u32 %s44, 1
        %s184 = smul.addr %s183, 8
        %s185 = scalar_lea.vmem [#allocation2], %s184
        // Predicated region
        $region29: #{tpu_custom_call.1} parent=27 // pred_check
          %p186 = pneg %p57
        $region30: #{tpu_custom_call.1} parent=27 // pred_check_branch
          %188 = sbr.rel (%p186) target = $region32
        $region31: #{tpu_custom_call.1} parent=27 // pred_region
          %189 = dma.done %s182, 128
        $region32: #{tpu_custom_call.1} parent=27 // pred_fallthru
          _
        %s190 = sand.u32 %s72, 1
        %s191 = scalar_lea.sflag [#allocation6], %s190
        %s192 = sand.u32 %s72, 1
        %s193 = smul.addr %s192, 2
        %s194 = scalar_lea.vmem [#allocation5], %s193
        // Predicated region
        $region33: #{tpu_custom_call.1} parent=27 // pred_check
          %p195 = pneg %p85
        $region34: #{tpu_custom_call.1} parent=27 // pred_check_branch
          %197 = sbr.rel (%p195) target = $region36
        $region35: #{tpu_custom_call.1} parent=27 // pred_region
          %198 = dma.done %s191, 32
        $region36: #{tpu_custom_call.1} parent=27 // pred_fallthru
          _
        %s199 = sand.u32 %s44, 1
        %s200 = scalar_lea.sflag [#allocation3], %s199
        %s201 = sand.u32 %s44, 1
        %s202 = smul.addr %s201, 8
        %s203 = scalar_lea.vmem [#allocation2], %s202
        %p204 = pneg %p57
        %p205 = pneg %p54
        %s206 = sand.u32 %s72, 1
        %s207 = scalar_lea.sflag [#allocation6], %s206
        %s208 = sand.u32 %s72, 1
        %s209 = smul.addr %s208, 2
        %s210 = scalar_lea.vmem [#allocation5], %s209
        %p211 = pneg %p85
        %p212 = pneg %p82
        %p213 = pneg %p113
        %p214 = pneg %p110
        %s215 = sand.u32 %s100, 1
        %s216 = scalar_lea.sflag [#allocation4], %s215
        %s217 = sand.u32 %s100, 1
        %s218 = scalar_lea.vmem [#allocation7], %s217
        %s219 = smul.u32 2, %s27
        %s220 = smul.u32 2, %s27
        %v221 = vld [vmem:[%s185] sm:$0xff]
        %v222 = vld [vmem:[%s194] sm:$0x3]
        %vm223 = vcmp.eq.f32.partialorder %v222, 1.0
        %v224 = vsub.f32 1.0, %v221
        %v225 = vsel %vm223, 1, 0
        %v226 = vlaneseq
        %v227 = vshrl.u32 %v226, 7
        %v228 = vsub.s32 0, %v227
        %v229 = vrot.slane %v225, %v228
        %v230 = vlaneseq
        %v231 = vshrl.u32 %v230, 7
        %v232 = vsub.s32 1, %v231
        %v233 = vrot.slane %v225, %v232
        %vm234 = vcmp.eq.s32.totalorder %v229, 1
        %vm235 = vcmp.eq.s32.totalorder %v233, 1
        %v237 = vcombine.high %v221, %v221
        %v240 = vcombine.high %v224, %v224
        %v242 = vsel %vm234, %v221, %v224
        %v243 = vsel %vm235, %v237, %v240
        %v244 = vsel %vm223, 0.75, 0.25
        %v245 = vsub.f32 0.0, %v244
        %v246 = vsub.f32 1.0, %v242
        %v247 = vsub.f32 1.0, %v243
        %v248 = vmul.f32 %v246, %v246
        %v249 = vmul.f32 %v247, %v247
        %v251 = vlaneseq
        %v252 = vshrl.u32 %v251, 7
        %v253 = vsub.s32 0, %v252
        %v254 = vrot.slane %v245, %v253
        %v255 = vlaneseq
        %v256 = vshrl.u32 %v255, 7
        %v257 = vsub.s32 1, %v256
        %v258 = vrot.slane %v245, %v257
        %v261 = vmul.f32 %v254, %v248
        %v262 = vmul.f32 %v258, %v249
        %v263 = vlog2.pop %v242
        %v264 = vmul.f32 %v263, 0.6931472
        %v265 = vlog2.pop %v243
        %v266 = vmul.f32 %v265, 0.6931472
        %v267 = vmul.f32 %v261, %v264
        %v268 = vmul.f32 %v262, %v266
        %v269 = vadd.f32 %v267, %v268
        %v270 = vadd.f32 %v269, 0.0
        %vm271 = vcmask 1043456
        %v272 = vsel %vm271, %v270, 0.0
        %v273 = vrot.slane %v272, 4
        %v274 = vadd.f32 %v272, %v273
        %v275 = vrot.slane %v274, 2
        %v276 = vadd.f32 %v274, %v275
        %v277 = vrot.slane %v276, 1
        %v278 = vadd.f32 %v276, %v277
        %v279 = vadd.f32 %v278, 0.0
        %280 = vst [vmem:[%s218] sm:$0x1] %v279
        %s281 = sand.u32 %s100, 1
        %s282 = scalar_lea.sflag [#allocation4], %s281
        %s283 = sand.u32 %s100, 1
        %s284 = scalar_lea.vmem [#allocation7], %s283
        // Predicated region
        $region37: #{tpu_custom_call.1} parent=27 // pred_check
          %p285 = pneg %p110
        $region38: #{tpu_custom_call.1} parent=27 // pred_check_branch
          %287 = sbr.rel (%p285) target = $region40
        $region39: #{tpu_custom_call.1} parent=27 // pred_region
          %s289 = ssub.s32 16, 16
          %290 = vsyncadd %s282, %s289
          %s291 = sadd.s32 %s27, %s26
          %s292 = smul.addr %s291, 16
          %s293 = scalar_lea.hbm %s2, %s292
          %s295 = sshll.u32 %s284, 4
          %s296 = int_to_ptr.vmem [resolvable:$true] %s295
          %298 = dma.vmem_to_hbm [thread:$0]  %s296, 16, %s293, %s282
        $region40: #{tpu_custom_call.1} parent=27 // pred_fallthru
          _
      $region28: #{tpu_custom_call.1} parent=5 // pred_fallthru
        _
      %p299 = scmp.le.s32.totalorder 2, %s17
      // Predicated region
      $region41: #{tpu_custom_call.1} parent=5 // pred_check
        %p300 = pneg %p299
      $region42: #{tpu_custom_call.1} parent=5 // pred_check_branch
        %302 = sbr.rel (%p300) target = $region44
      $region43: #{tpu_custom_call.1} parent=5 // pred_region
        %s303 = ssub.s32 %s17, 2
        // Predicated region
        $region45: #{tpu_custom_call.1} parent=43 // pred_check
          %p304 = pneg %p116
        $region46: #{tpu_custom_call.1} parent=43 // pred_check_branch
          %306 = sbr.rel (%p304) target = $region48
        $region47: #{tpu_custom_call.1} parent=43 // pred_region
          %s307 = sand.u32 %s101, 1
          %s308 = scalar_lea.sflag [#allocation4], %s307
          %s309 = sand.u32 %s101, 1
          %s310 = scalar_lea.vmem [#allocation7], %s309
          %311 = dma.done %s308, 16
        $region48: #{tpu_custom_call.1} parent=43 // pred_fallthru
          _
      $region44: #{tpu_custom_call.1} parent=5 // pred_fallthru
        _
    $region6: #{tpu_custom_call.1} parent=1 // loop_footer
      %s21 = sadd.s32 1, %s17
    $region7: #{tpu_custom_call.1} parent=1 // loop_footer_branch
      %16 = sbr.rel target = $region3
    $region8: #{tpu_custom_call.1} parent=1 // loop_exit
      _
    %312 = vsyncpa [#allocation3], 1
    %s313 = scalar_lea.sflag [#allocation3], 1
    %314 = vsyncpa %s313, 1
    %315 = vsyncpa [#allocation6], 1
    %s316 = scalar_lea.sflag [#allocation6], 1
    %317 = vsyncpa %s316, 1
    %318 = vsyncpa [#allocation4], 1
    %s319 = scalar_lea.sflag [#allocation4], 1
    %320 = vsyncpa %s319, 1

</llo_original>
